<compile_context>
chip_gen: v7x
topology: tpu7x:2x2x1
jax: 0.10.0
libtpu: 0.0.40
codegen_flags: <defaults>
</compile_context>

<pallas_src>
import math
import numpy as np
import jax
import jax.numpy as jnp
from jax.experimental import pallas as pl
from jax.experimental.pallas import tpu as pltpu


# ---------------------------------------------------------------------------
# Filterbank construction (equivalent of torchaudio.functional.melscale_fbanks)
# ---------------------------------------------------------------------------
def _hz_to_mel(freq: np.ndarray, mel_scale: str = "htk") -> np.ndarray:
    if mel_scale == "htk":
        return 2595.0 * np.log10(1.0 + freq / 700.0)
    # slaney
    f_min, f_sp = 0.0, 200.0 / 3.0
    mels = (freq - f_min) / f_sp
    min_log_hz = 1000.0
    min_log_mel = (min_log_hz - f_min) / f_sp
    logstep = math.log(6.4) / 27.0
    mels = np.where(freq >= min_log_hz,
                    min_log_mel + np.log(np.maximum(freq, min_log_hz) / min_log_hz) / logstep,
                    mels)
    return mels


def _mel_to_hz(mels: np.ndarray, mel_scale: str = "htk") -> np.ndarray:
    if mel_scale == "htk":
        return 700.0 * (10.0 ** (mels / 2595.0) - 1.0)
    # slaney
    f_min, f_sp = 0.0, 200.0 / 3.0
    freqs = f_min + f_sp * mels
    min_log_hz = 1000.0
    min_log_mel = (min_log_hz - f_min) / f_sp
    logstep = math.log(6.4) / 27.0
    freqs = np.where(mels >= min_log_mel,
                     min_log_hz * np.exp(logstep * (mels - min_log_mel)),
                     freqs)
    return freqs


def melscale_fbanks(n_freqs: int, f_min: float, f_max: float, n_mels: int,
                    sample_rate: int, norm=None, mel_scale: str = "htk") -> np.ndarray:
    """Returns fb of shape (n_freqs, n_mels), float32."""
    all_freqs = np.linspace(0.0, sample_rate // 2, n_freqs)
    m_min = _hz_to_mel(np.array(f_min), mel_scale)
    m_max = _hz_to_mel(np.array(f_max), mel_scale)
    m_pts = np.linspace(m_min, m_max, n_mels + 2)
    f_pts = _mel_to_hz(m_pts, mel_scale)

    # triangular filterbank
    f_diff = f_pts[1:] - f_pts[:-1]                       # (n_mels + 1,)
    slopes = f_pts[None, :] - all_freqs[:, None]          # (n_freqs, n_mels + 2)
    down_slopes = (-1.0 * slopes[:, :-2]) / f_diff[:-1]   # (n_freqs, n_mels)
    up_slopes = slopes[:, 2:] / f_diff[1:]                # (n_freqs, n_mels)
    fb = np.maximum(0.0, np.minimum(down_slopes, up_slopes))

    if norm is not None and norm == "slaney":
        enorm = 2.0 / (f_pts[2:n_mels + 2] - f_pts[:n_mels])
        fb *= enorm[None, :]
    return fb.astype(np.float32)


def make_mel_fb(n_mels: int, sample_rate: int, f_min: float, f_max, n_stft: int,
                norm, mel_scale: str) -> np.ndarray:
    """MelScale.__init__ logic: build fb (n_stft, n_mels)."""
    f_max = f_max if f_max is not None else float(sample_rate // 2)
    if f_min > f_max:
        raise ValueError(f"Require f_min: {f_min} < f_max: {f_max}")
    if norm is None or norm == "slaney":
        fb = melscale_fbanks(n_stft, f_min, f_max, n_mels, sample_rate, norm, mel_scale)
    elif norm > 0:
        fb = melscale_fbanks(n_stft, f_min, f_max, n_mels, sample_rate, None, mel_scale)
        denom = np.sum(np.abs(fb) ** norm, axis=0, keepdims=True) ** (1.0 / norm)
        # NOTE: minor deviation from torch -- zero-norm (empty) mel columns are
        # left as zeros here instead of turning into NaN columns.
        denom = np.where(denom == 0.0, 1.0, denom)
        fb = fb / denom
    else:
        raise ValueError('norm must be None, "slaney", or a positive value.')
    return fb.astype(np.float32)


# ---------------------------------------------------------------------------
# Pallas kernel: out[b, :, t0:t0+Tt] = fb_t @ spec[b, :, t0:t0+Tt]
# ---------------------------------------------------------------------------
def melscale_kernel(spec_ref, fbt_ref, out_ref):
    # spec_ref: (1, F, Tt), fbt_ref: (M, F), out_ref: (1, M, Tt)
    out = jax.lax.dot_general(
        fbt_ref[...], spec_ref[0],
        dimension_numbers=(((1,), (0,)), ((), ())),   # (M,F) @ (F,Tt) -> (M,Tt)
        preferred_element_type=jnp.float32,
    )
    out_ref[0] = out.astype(out_ref.dtype)


def mel_scale_forward(specgram: jax.Array, fb: jax.Array, *, t_tile: int = 512) -> jax.Array:
    """specgram: (..., F, T); fb: (F, M)  ->  (..., M, T).

    t_tile: time-tile width (multiple of 128). 512 keeps the double-buffered
    VMEM footprint small enough for all of v5e/v6e/v7x default scoped VMEM.
    """
    orig_shape = specgram.shape
    F, T = int(orig_shape[-2]), int(orig_shape[-1])
    lead = orig_shape[:-2]
    B = int(np.prod(lead)) if lead else 1
    spec = specgram.reshape(B, F, T)

    F2, M = fb.shape
    assert F == F2, f"fb freq dim {F2} != specgram freq dim {F}"
    # Pre-transpose once so the MXU sees a standard (M,K)@(K,N) contraction
    # with the large F axis lane-dense; avoids per-step layout work.
    fb_t = jnp.asarray(fb, dtype=jnp.float32).T          # (M, F)

    if T <= t_tile:
        # single full-extent time block: no padding, minimal grid overhead
        t_block, n_t, t_pad = T, 1, T
    else:
        t_block = t_tile
        n_t = -(-T // t_tile)
        t_pad = n_t * t_tile
        if t_pad != T:
            # zero-pad time so every tile is a full 128-multiple block
            # (zero columns produce zero output columns, sliced off below)
            spec = jnp.pad(spec, ((0, 0), (0, 0), (0, t_pad - T)))

    out = pl.pallas_call(
        melscale_kernel,
        out_shape=jax.ShapeDtypeStruct((B, M, t_pad), specgram.dtype),
        grid=(B, n_t),
        in_specs=[
            # stream (F, Tt) spectrogram tiles per (batch, time-tile) step
            pl.BlockSpec((1, F, t_block), lambda b, t: (b, 0, t)),
            # tiny filterbank: constant index_map -> stays VMEM-resident
            pl.BlockSpec((M, F), lambda b, t: (0, 0)),
        ],
        out_specs=pl.BlockSpec((1, M, t_block), lambda b, t: (b, 0, t)),
        compiler_params=pltpu.CompilerParams(
            # both grid axes are independent -> megacore sharding on v7x
            dimension_semantics=("parallel", "parallel"),
        ),
    )(spec, fb_t)

    if t_pad != T:
        out = out[:, :, :T]
    return out.reshape(*lead, M, T)


# ---------------------------------------------------------------------------
if __name__ == "__main__":
    # Small shapes consistent with the module: batch of spectrograms (B, n_stft, time)
    B = 2
    n_stft = 65          # e.g. n_fft = 128
    time = 16
    n_mels = 16
    sample_rate = 16000

    # MelScale defaults: f_min=0, f_max=sr//2, norm=1 (l1), mel_scale='htk'
    fb_np = make_mel_fb(n_mels=n_mels, sample_rate=sample_rate, f_min=0.0,
                        f_max=None, n_stft=n_stft, norm=1, mel_scale="htk")
    fb = jnp.asarray(fb_np)

    key = jax.random.PRNGKey(0)
    k1, k2 = jax.random.split(key)

    # Case 1: tiny time axis -> single full-extent time block
    specgram = jax.random.uniform(k1, (B, n_stft, time), dtype=jnp.float32)
    out = jax.block_until_ready(mel_scale_forward(specgram, fb))
    ref = jnp.swapaxes(jnp.matmul(jnp.swapaxes(specgram, -1, -2), fb), -1, -2)
    assert out.shape == (B, n_mels, time)
    np.testing.assert_allclose(np.asarray(out), np.asarray(ref), rtol=1e-5, atol=1e-5)

    # Case 2: longer, non-128-multiple time axis -> exercises time tiling + padding
    time2 = 1037
    specgram2 = jax.random.uniform(k2, (B, n_stft, time2), dtype=jnp.float32)
    out2 = jax.block_until_ready(mel_scale_forward(specgram2, fb))
    ref2 = jnp.swapaxes(jnp.matmul(jnp.swapaxes(specgram2, -1, -2), fb), -1, -2)
    assert out2.shape == (B, n_mels, time2)
    np.testing.assert_allclose(np.asarray(out2), np.asarray(ref2), rtol=1e-5, atol=1e-5)

    print("KERNEL_OK")
</pallas_src>

<mosaic_0001>
module attributes {stable_mosaic.version = 11 : i64} {
  func.func @melscale_kernel(%arg0: i32, %arg1: i32, %arg2: memref<1x65x16xf32, #tpu.memory_space<vmem>>, %arg3: memref<16x65xf32, #tpu.memory_space<vmem>>, %arg4: memref<1x16x16xf32, #tpu.memory_space<vmem>>) attributes {dimension_semantics = [#tpu.dimension_semantics<parallel>, #tpu.dimension_semantics<parallel>], iteration_bounds = array<i64: 2, 1>, scalar_prefetch = 0 : i64, scratch_operands = 0 : i64, tpu.core_type = #tpu.core_type<tc>, window_params = [{transform_indices = @transform_0, window_bounds = array<i64: 1, 65, 16>}, {pipeline_mode = #tpu.pipeline_mode<synchronous>, transform_indices = @transform_1, window_bounds = array<i64: 16, 65>}, {transform_indices = @transform_2, window_bounds = array<i64: 1, 16, 16>}]} {
    %c0 = arith.constant 0 : index
    %c0_0 = arith.constant 0 : index
    %0 = vector.load %arg3[%c0, %c0_0] : memref<16x65xf32, #tpu.memory_space<vmem>>, vector<16x65xf32>
    %c0_1 = arith.constant 0 : index
    %c0_2 = arith.constant 0 : index
    %c0_3 = arith.constant 0 : index
    %1 = vector.load %arg2[%c0_1, %c0_2, %c0_3] : memref<1x65x16xf32, #tpu.memory_space<vmem>>, vector<1x65x16xf32>
    %2 = vector.shape_cast %1 : vector<1x65x16xf32> to vector<65x16xf32>
    %cst = arith.constant dense<0.000000e+00> : vector<16x16xf32>
    %3 = tpu.matmul %0, %2, %cst {dimension_numbers = #tpu.dot_dimension_numbers<[1], [0], [0], [1], [0, 0, 1, 1], [], []>} : vector<16x65xf32>, vector<65x16xf32>, vector<16x16xf32> -> vector<16x16xf32>
    %c0_4 = arith.constant 0 : index
    %c0_5 = arith.constant 0 : index
    %c0_6 = arith.constant 0 : index
    %4 = vector.load %arg4[%c0_4, %c0_5, %c0_6] : memref<1x16x16xf32, #tpu.memory_space<vmem>>, vector<1x16x16xf32>
    %5 = vector.shape_cast %4 : vector<1x16x16xf32> to vector<16x16xf32>
    %6 = vector.shape_cast %3 : vector<16x16xf32> to vector<1x16x16xf32>
    tpu.vector_store %arg4[%c0_4, %c0_5, %c0_6], %6 {strides = array<i32>} : memref<1x16x16xf32, #tpu.memory_space<vmem>>, vector<1x16x16xf32>,
    return
  }
  func.func @transform_0(%arg0: i32, %arg1: i32) -> (i32, i32, i32) {
    %c0_i32 = arith.constant 0 : i32
    %c0_i32_0 = arith.constant 0 : i32
    return %arg0, %c0_i32, %arg1 : i32, i32, i32
  }
  func.func @transform_1(%arg0: i32, %arg1: i32) -> (i32, i32) {
    %c0_i32 = arith.constant 0 : i32
    %c0_i32_0 = arith.constant 0 : i32
    %c0_i32_1 = arith.constant 0 : i32
    return %c0_i32, %c0_i32_0 : i32, i32
  }
  func.func @transform_2(%arg0: i32, %arg1: i32) -> (i32, i32, i32) {
    %c0_i32 = arith.constant 0 : i32
    %c0_i32_0 = arith.constant 0 : i32
    return %arg0, %c0_i32, %arg1 : i32, i32, i32
  }
}

</mosaic_0001>

<llo_original>
// kernel: tpu_custom_call.1
$region0: #{tpu_custom_call.1}
  #allocation0 [shape = 'u32[]', space=smem, size = 0x4, offset = 0x4, fixed_abs, tag = 'smem constant byte address 0x4 - core index']
  #allocation1 [shape = 'u32[144,128]{1,0:T(1,128)}', space=vmem, size = 0x12000, scoped, tag = 'internal scratch']
  %s0 = inlined_call_operand.vmem [shape: f32[2,65,16], index: 0, kind: input, shape index: {}]
  %s1 = inlined_call_operand.vmem [shape: f32[16,65], index: 1, kind: input, shape index: {}]
  %s2 = inlined_call_operand.hbm [shape: f32[2,16,16], index: 2, kind: output, shape index: {}]
  %s3 = sld [smem:[#allocation0]]
  $region41: #{tpu_custom_call.1} parent=0
    _
  %s5 = ssub.s32 1, %s3
  %s6 = scalar_select 0, %s5, %s3
  $region1: #{tpu_custom_call.1} parent=0
    #allocation2 [shape = 'u8[16384]{0}', space=vmem, size = 0x4000, scoped, tag = 'output window, operand 0']
    #allocation3 [shape = 's32[2]{0}', space=sflag, size = 0x8, scoped, tag = 'scoped memory for tpu_custom_call.1']
    %7 = vsyncpa [#allocation3], 0
    %s8 = scalar_lea.sflag [#allocation3], 1
    %9 = vsyncpa %s8, 0
    loop: start=0, step=1, limit=4
    $region2: #{tpu_custom_call.1} parent=1 // loop_pre_header
      _
    $region3: #{tpu_custom_call.1} parent=1 // loop_header
      %s11 = sphi 0, %s15
      %p12 = scmp.ge.s32.totalorder %s11, 4
      %s18 = sphi 0, %s30
      %s19 = sphi 0, %s26
      %s20 = sphi 0, %s18
      %s21 = sphi 0, %s19
      %s22 = sphi 0, %s20
      %s23 = sphi 0, %s21
      %s35 = sphi 0, %s37
      %s38 = sphi 0, %s35
      %s39 = sphi 0, %s38
      %s55 = sphi 0, %s39
      %s59 = sphi 0, %s59
      %s61 = sphi 0, %s59
      %s62 = sphi 0, %s61
      %s76 = sphi 0, %s62
      %s84 = sphi 0, %s86
      %s87 = sphi 0, %s84
      %s88 = sphi 0, %s87
      %s104 = sphi 0, %s88
    $region4: #{tpu_custom_call.1} parent=1 // loop_header_branch
      %14 = sbr.rel (%p12) target = $region8
    $region5: #{tpu_custom_call.1} parent=1 // loop_body
      %s16 = ssub.s32 %s11, 1
      %s17 = ssub.s32 %s11, 2
      %s24 = sadd.s32 1, %s19
      %p25 = scmp.ge.s32.totalorder %s24, 1
      %s26 = scalar_select %p25, 0, %s24
      %s27 = sadd.s32 1, %s18
      %s28 = scalar_select %p25, %s27, %s18
      %p29 = scmp.ge.s32.totalorder %s28, 2
      %s30 = scalar_select %p29, 0, %s28
      %s31 = ssub.s32 %s18, %s30
      %s32 = ssub.s32 %s19, %s26
      %s33 = sor.u32 %s31, %s32
      %p34 = scmp.eq.s32.totalorder %s33, 0
      %s36 = sadd.s32 %s35, 1
      %s37 = scalar_select %p34, %s35, %s36
      %p40 = pneg %p34
      %p41 = scmp.eq.s32.totalorder %s11, 1
      %p42 = por %p40, %p41
      %p43 = scmp.ne.s32.totalorder %s35, %s38
      %p44 = scmp.eq.s32.totalorder %s11, 0
      %p45 = por %p43, %p44
      %p46 = scmp.ne.s32.totalorder %s35, %s38
      %p47 = scmp.eq.s32.totalorder %s16, 1
      %p48 = por %p46, %p47
      %p49 = scmp.ne.s32.totalorder %s38, %s39
      %p50 = scmp.eq.s32.totalorder %s16, 0
      %p51 = por %p49, %p50
      %p52 = scmp.ne.s32.totalorder %s38, %s39
      %p53 = scmp.eq.s32.totalorder %s17, 1
      %p54 = por %p52, %p53
      %p56 = scmp.ne.s32.totalorder %s39, %s55
      %p57 = scmp.eq.s32.totalorder %s17, 0
      %p58 = por %p56, %p57
      %s60 = sadd.s32 %s59, 1
      %p63 = scmp.eq.s32.totalorder %s11, 1
      %p64 = scmp.ne.s32.totalorder %s59, %s61
      %p65 = scmp.eq.s32.totalorder %s11, 0
      %p66 = por %p64, %p65
      %p67 = scmp.ne.s32.totalorder %s59, %s61
      %p68 = scmp.eq.s32.totalorder %s16, 1
      %p69 = por %p67, %p68
      %p70 = scmp.ne.s32.totalorder %s61, %s62
      %p71 = scmp.eq.s32.totalorder %s16, 0
      %p72 = por %p70, %p71
      %p73 = scmp.ne.s32.totalorder %s61, %s62
      %p74 = scmp.eq.s32.totalorder %s17, 1
      %p75 = por %p73, %p74
      %p77 = scmp.ne.s32.totalorder %s62, %s76
      %p78 = scmp.eq.s32.totalorder %s17, 0
      %p79 = por %p77, %p78
      %s80 = ssub.s32 %s18, %s30
      %s81 = ssub.s32 %s19, %s26
      %s82 = sor.u32 %s80, %s81
      %p83 = scmp.eq.s32.totalorder %s82, 0
      %s85 = sadd.s32 %s84, 1
      %s86 = scalar_select %p83, %s84, %s85
      %p89 = pneg %p83
      %p90 = scmp.eq.s32.totalorder %s11, 1
      %p91 = por %p89, %p90
      %p92 = scmp.ne.s32.totalorder %s84, %s87
      %p93 = scmp.eq.s32.totalorder %s11, 0
      %p94 = por %p92, %p93
      %p95 = scmp.ne.s32.totalorder %s84, %s87
      %p96 = scmp.eq.s32.totalorder %s16, 1
      %p97 = por %p95, %p96
      %p98 = scmp.ne.s32.totalorder %s87, %s88
      %p99 = scmp.eq.s32.totalorder %s16, 0
      %p100 = por %p98, %p99
      %p101 = scmp.ne.s32.totalorder %s87, %s88
      %p102 = scmp.eq.s32.totalorder %s17, 1
      %p103 = por %p101, %p102
      %p105 = scmp.ne.s32.totalorder %s88, %s104
      %p106 = scmp.eq.s32.totalorder %s17, 0
      %p107 = por %p105, %p106
      %p108 = scmp.le.s32.totalorder 1, %s11
      %p109 = scmp.lt.s32.totalorder %s11, 3
      %p110 = pnand %p108, %p109
      %p111 = pneg %p110
      // Predicated region
      $region9: #{tpu_custom_call.1} parent=5 // pred_check
        _
      $region10: #{tpu_custom_call.1} parent=5 // pred_check_branch
        %113 = sbr.rel (%p110) target = $region12
      $region11: #{tpu_custom_call.1} parent=5 // pred_region
        %s114 = ssub.s32 %s11, 1
        // Predicated region
        $region13: #{tpu_custom_call.1} parent=11 // pred_check
          %p115 = pneg %p72
        $region14: #{tpu_custom_call.1} parent=11 // pred_check_branch
          %117 = sbr.rel (%p115) target = $region16
        $region15: #{tpu_custom_call.1} parent=11 // pred_region
          _
        $region16: #{tpu_custom_call.1} parent=11 // pred_fallthru
          _
      $region12: #{tpu_custom_call.1} parent=5 // pred_fallthru
        _
      %p118 = scmp.lt.s32.totalorder %s11, 2
      // Predicated region
      $region17: #{tpu_custom_call.1} parent=5 // pred_check
        %p119 = pneg %p118
      $region18: #{tpu_custom_call.1} parent=5 // pred_check_branch
        %121 = sbr.rel (%p119) target = $region20
      $region19: #{tpu_custom_call.1} parent=5 // pred_region
        // Predicated region
        $region21: #{tpu_custom_call.1} parent=19 // pred_check
          %p122 = pneg %p45
        $region22: #{tpu_custom_call.1} parent=19 // pred_check_branch
          %124 = sbr.rel (%p122) target = $region24
        $region23: #{tpu_custom_call.1} parent=19 // pred_region
          %p125 = scmp.lt.s32.totalorder %s18, 1
          %s126 = scalar_select %p125, %s18, 1
          %p127 = scmp.lt.s32.totalorder %s19, 0
          %s128 = scalar_select %p127, %s19, 0
          %s129 = smul.addr %s126, 9
          %s130 = sadd.s32 %s128, %s129
          %s131 = smul.addr %s130, 8
          %s132 = scalar_lea.vmem %s0, %s131
        $region24: #{tpu_custom_call.1} parent=19 // pred_fallthru
          _
      $region20: #{tpu_custom_call.1} parent=5 // pred_fallthru
        _
      %p133 = scmp.le.s32.totalorder 1, %s11
      %p134 = scmp.lt.s32.totalorder %s11, 3
      %p135 = pnand %p133, %p134
      %p136 = pneg %p135
      // Predicated region
      $region25: #{tpu_custom_call.1} parent=5 // pred_check
        _
      $region26: #{tpu_custom_call.1} parent=5 // pred_check_branch
        %138 = sbr.rel (%p135) target = $region28
      $region27: #{tpu_custom_call.1} parent=5 // pred_region
        %s139 = ssub.s32 %s11, 1
        %p140 = scmp.lt.s32.totalorder %s20, 1
        %s141 = scalar_select %p140, %s20, 1
        %p142 = scmp.lt.s32.totalorder %s21, 0
        %s143 = scalar_select %p142, %s21, 0
        %s144 = smul.addr %s141, 9
        %s145 = sadd.s32 %s143, %s144
        %s146 = smul.addr %s145, 8
        %s147 = scalar_lea.vmem %s0, %s146
        %p148 = pneg %p51
        %p149 = pneg %p48
        %p150 = pneg %p72
        %p151 = pneg %p69
        %p152 = pneg %p100
        %p153 = pneg %p97
        %s154 = sand.u32 %s87, 1
        %s155 = scalar_lea.sflag [#allocation3], %s154
        %s156 = sand.u32 %s87, 1
        %s157 = smul.addr %s156, 16
        %s158 = scalar_lea.vmem [#allocation2], %s157
        %p159 = scmp.lt.s32.totalorder %s20, 1
        %s160 = scalar_select %p159, %s20, 1
        %p161 = scmp.lt.s32.totalorder %s21, 0
        %s162 = scalar_select %p161, %s21, 0
        %s163 = smul.addr %s160, 9
        %s164 = sadd.s32 %s162, %s163
        %s165 = smul.addr %s164, 8
        %s166 = scalar_lea.vmem %s0, %s165
        %v167 = vld [vmem:[%s1] sm:$0xff]
        %v168 = vld [vmem:[%s1 + $0x8] sm:$0xff]
        %v169 = vld [vmem:[%s166] sm:$0xff]
        %v170 = vld [vmem:[%s166 + $0x8] sm:$0xff]
        %v171 = vld [vmem:[%s166 + $0x10] sm:$0xff]
        %v172 = vld [vmem:[%s166 + $0x18] sm:$0xff]
        %v173 = vld [vmem:[%s166 + $0x20] sm:$0xff]
        %v174 = vld [vmem:[%s166 + $0x28] sm:$0xff]
        %v175 = vld [vmem:[%s166 + $0x30] sm:$0xff]
        %v176 = vld [vmem:[%s166 + $0x38] sm:$0xff]
        %v177 = vld [vmem:[%s166 + $0x40] sm:$0x1]
        %vm178 = vcmask 531456
        %v180 = vsel %vm178, %v167, 0
        %v183 = vsel %vm178, %v168, 0
        %vm185 = vcmask 1040384
        %v187 = vsel %vm185, %v177, 0
        %189 = vmatprep.subr.mxu0 0.0
        %190 = vmatpush1.msra.mxu0 %v169
        %191 = vmatprep.subr.mxu0 0.0
        %192 = vmatpush1.msra.mxu0 %v170
        %193 = vmatprep.subr.mxu0 0.0
        %194 = vmatpush1.msra.mxu0 %v171
        %195 = vmatprep.subr.mxu0 0.0
        %196 = vmatpush1.msra.mxu0 %v172
        %197 = vmatprep.subr.mxu0 0.0
        %198 = vmatpush1.msra.mxu0 %v173
        %199 = vmatprep.subr.mxu0 0.0
        %200 = vmatpush1.msra.mxu0 %v174
        %201 = vmatprep.subr.mxu0 0.0
        %202 = vmatpush1.msra.mxu0 %v175
        %203 = vmatprep.subr.mxu0 0.0
        %204 = vmatpush1.msra.mxu0 %v176
        %205 = vmatprep.subr.mxu0 0.0
        %206 = vmatpush1.msra.mxu0 %v187
        %207 = vmatprep.subr.mxu0 0.0
        %208 = vmatpush1.msra.mxu0 0.0
        %209 = vmatprep.subr.mxu0 0.0
        %210 = vmatpush1.msra.mxu0 0.0
        %211 = vmatprep.subr.mxu0 0.0
        %212 = vmatpush1.msra.mxu0 0.0
        %213 = vmatprep.subr.mxu0 0.0
        %214 = vmatpush1.msra.mxu0 0.0
        %215 = vmatprep.subr.mxu0 0.0
        %216 = vmatpush1.msra.mxu0 0.0
        %217 = vmatprep.subr.mxu0 0.0
        %218 = vmatpush1.msra.mxu0 0.0
        %219 = vmatprep.subr.mxu0 0.0
        %220 = vmatpush1.msra.mxu0 0.0
        %221 = vmatprep.subr.mxu0 0.0
        %222 = vmatpush1.msra.mxu0 0.0
        %223 = vmatprep.subr.mxu0 0.0
        %224 = vmatpush1.msra.mxu0 0.0
        %225 = vmatprep.subr.mxu0 0.0
        %226 = vmatpush1.msra.mxu0 0.0
        %227 = vmatprep.subr.mxu0 0.0
        %228 = vmatpush1.msra.mxu0 0.0
        %229 = vmatprep.subr.mxu0 0.0
        %230 = vmatpush1.msra.mxu0 0.0
        %231 = vmatprep.subr.mxu0 0.0
        %232 = vmatpush1.msra.mxu0 0.0
        %233 = vmatprep.subr.mxu0 0.0
        %234 = vmatpush1.msra.mxu0 0.0
        %235 = vmatprep.subr.mxu0 0.0
        %236 = vmatpush1.msra.mxu0 0.0
        %237 = vmatprep.subr.mxu0 0.0
        %238 = vmatpush1.msra.mxu0 0.0
        %239 = vmatprep.subr.mxu0 0.0
        %240 = vmatpush1.msra.mxu0 0.0
        %241 = vmatprep.subr.mxu0 0.0
        %242 = vmatpush1.msra.mxu0 0.0
        %243 = vmatprep.subr.mxu0 0.0
        %244 = vmatpush1.msra.mxu0 0.0
        %245 = vmatprep.subr.mxu0 0.0
        %246 = vmatpush1.msra.mxu0 0.0
        %247 = vmatprep.subr.mxu0 0.0
        %248 = vmatpush1.msra.mxu0 0.0
        %249 = vmatprep.subr.mxu0 0.0
        %250 = vmatpush1.msra.mxu0 0.0
        %251 = vmatprep.subr.mxu0 0.0
        %252 = vmatpush1.msra.mxu0 0.0
        %253 = vmatprep.mubr.f32.mxu0 0.0
        %254 = vmatmul.mubr.f32.gmra.mrb[0].mxu0 %v180
        %v255 = vpop.f32.mrb[0].mxu0
        %v256 = vadd.f32 0.0, %v255
        %v257 = vpop.f32.mrb[0].mxu0
        %258 = vmatprep.mubr.f32.mxu0 0.0
        %259 = vmatmul.mubr.f32.gmra.mrb[0].mxu0 %v183
        %v260 = vpop.f32.mrb[0].mxu0
        %v261 = vadd.f32 0.0, %v260
        %v262 = vpop.f32.mrb[0].mxu0
        %263 = vdwg.mxu0
        %vm264 = vcmask 130048
        %265 = vst.msk [vmem:[%s158] sm:$0xff] %vm264, %v256
        %266 = vst.msk [vmem:[%s158 + $0x8] sm:$0xff] %vm264, %v261
        %s267 = sand.u32 %s87, 1
        %s268 = scalar_lea.sflag [#allocation3], %s267
        %s269 = sand.u32 %s87, 1
        %s270 = smul.addr %s269, 16
        %s271 = scalar_lea.vmem [#allocation2], %s270
        // Predicated region
        $region29: #{tpu_custom_call.1} parent=27 // pred_check
          %p272 = pneg %p97
        $region30: #{tpu_custom_call.1} parent=27 // pred_check_branch
          %274 = sbr.rel (%p272) target = $region32
        $region31: #{tpu_custom_call.1} parent=27 // pred_region
          %s276 = ssub.s32 256, 256
          %277 = vsyncadd %s268, %s276
          %s278 = smul.addr %s20, 2
          %s279 = sadd.s32 %s21, %s278
          %s280 = smul.addr %s279, 128
          %s281 = scalar_lea.hbm %s2, %s280
          %s282 = sshll.u32 %s271, 4
          %s283 = int_to_ptr.vmem [resolvable:$true] %s282
          %288 = dma.vmem_to_hbm [thread:$0]  %s283, 256, %s281, %s268, 128, 128, 8
        $region32: #{tpu_custom_call.1} parent=27 // pred_fallthru
          _
      $region28: #{tpu_custom_call.1} parent=5 // pred_fallthru
        _
      %p289 = scmp.le.s32.totalorder 2, %s11
      // Predicated region
      $region33: #{tpu_custom_call.1} parent=5 // pred_check
        %p290 = pneg %p289
      $region34: #{tpu_custom_call.1} parent=5 // pred_check_branch
        %292 = sbr.rel (%p290) target = $region36
      $region35: #{tpu_custom_call.1} parent=5 // pred_region
        %s293 = ssub.s32 %s11, 2
        // Predicated region
        $region37: #{tpu_custom_call.1} parent=35 // pred_check
          %p294 = pneg %p103
        $region38: #{tpu_custom_call.1} parent=35 // pred_check_branch
          %296 = sbr.rel (%p294) target = $region40
        $region39: #{tpu_custom_call.1} parent=35 // pred_region
          %s297 = sand.u32 %s88, 1
          %s298 = scalar_lea.sflag [#allocation3], %s297
          %s299 = sand.u32 %s88, 1
          %s300 = smul.addr %s299, 16
          %s301 = scalar_lea.vmem [#allocation2], %s300
          %302 = dma.done %s298, 256
        $region40: #{tpu_custom_call.1} parent=35 // pred_fallthru
          _
      $region36: #{tpu_custom_call.1} parent=5 // pred_fallthru
        _
    $region6: #{tpu_custom_call.1} parent=1 // loop_footer
      %s15 = sadd.s32 1, %s11
    $region7: #{tpu_custom_call.1} parent=1 // loop_footer_branch
      %10 = sbr.rel target = $region3
    $region8: #{tpu_custom_call.1} parent=1 // loop_exit
      _
    %303 = vsyncpa [#allocation3], 1
    %s304 = scalar_lea.sflag [#allocation3], 1
    %305 = vsyncpa %s304, 1

</llo_original>
